<compile_context>
chip_gen: v5e
topology: v5e:2x2
jax: 0.10.0
libtpu: 0.0.40
codegen_flags: <defaults>
</compile_context>

<pallas_src>
import jax
import jax.numpy as jnp
from jax.experimental import pallas as pl
from jax.experimental.pallas import tpu as pltpu

LANES = 128


def _cdiv(a, b):
    return -(-a // b)


def confidence_kernel(agent_ref, task_ref, w1a_ref, w1b_ref, b1_ref, w2_ref,
                      b2_ref, out_ref):
    # out_ref: (1, R, 128) with R = TB // 128 (batch packed onto lanes).
    r = out_ref.shape[1]
    # Layer 1: split-K MXU matmuls (no in-kernel concat / lane shift), f32 accum.
    h = jnp.dot(agent_ref[...], w1a_ref[...], preferred_element_type=jnp.float32)
    h = h + jnp.dot(task_ref[...], w1b_ref[...], preferred_element_type=jnp.float32)
    h = jnp.maximum(h + b1_ref[...], 0.0)                       # (TB, H) bias + ReLU (VPU)
    # Layer 2: VPU multiply + reduce over the hidden axis.  The (TB, H) ->
    # (R, 128, H) reshape is a pure sublane split (layout preserving); the reduce
    # lands the logits lane-dense as (R, 128), so the whole epilogue and the
    # store run on dense vregs.
    hw = h * w2_ref[...]                                        # (TB, H)
    hw = hw.reshape(r, LANES, hw.shape[-1])                     # (R, 128, H)
    logit = jnp.sum(hw, axis=-1) + b2_ref[0, 0]                 # (R, 128) lane-dense
    # Sigmoid: exp (EUP) + approximate reciprocal (EUP) -- no vector divide.
    out_ref[0] = pl.reciprocal(1.0 + jnp.exp(-logit), approx=True)


def _choose_tile(b_in, target):
    tb = max(LANES, (min(target, b_in) // LANES) * LANES)
    # Keep >= 2 grid steps when the batch allows it (v7x two-TC sharding).
    if b_in >= 2 * LANES and _cdiv(b_in, tb) < 2:
        tb = max(LANES, ((b_in // 2) // LANES) * LANES)
    return tb


def confidence_estimator(agent_caps, task_embeds, params, *, tb=8192):
    """agent_caps: (B, D), task_embeds: (B, D) -> conf: (B,) float32."""
    w1, b1, w2_row, b2 = params
    B, D = agent_caps.shape
    H = w1.shape[1]

    # Split W1 into agent / task halves (tiny one-time slice) so the kernel can
    # skip the in-kernel concat and its lane-shift relayout.
    w1a, w1b = w1[:D], w1[D:]
    # bf16 inputs supported (cast at the producer): match W1 dtype to the inputs
    # so the MXU takes the fast path.  Accumulation / epilogue stay f32.
    if agent_caps.dtype != w1a.dtype:
        w1a = w1a.astype(agent_caps.dtype)
        w1b = w1b.astype(agent_caps.dtype)

    # Tiny batches only: pad once up to one lane group (128 rows) so the
    # lane-dense output layout works.  Large batches are NOT padded; the grid
    # handles a ragged last block without an extra HBM pass.
    if B < LANES:
        pad = LANES - B
        agent_caps = jnp.pad(agent_caps, ((0, pad), (0, 0)))
        task_embeds = jnp.pad(task_embeds, ((0, pad), (0, 0)))
    b_in = agent_caps.shape[0]

    TB = _choose_tile(b_in, tb)
    R = TB // LANES
    G = _cdiv(b_in, TB)

    itemsize = jnp.dtype(agent_caps.dtype).itemsize
    # (TB, D) input blocks are padded to 128 lanes in VMEM; 2 inputs x 2 buffers,
    # plus lane-dense output blocks and headroom for the (TB, H) intermediates
    # and the (VMEM-resident) weights.
    in_block_bytes = TB * LANES * itemsize
    out_block_bytes = R * LANES * 4
    vmem_limit = min(4 * in_block_bytes + 2 * out_block_bytes + 24 * (1 << 20),
                     112 * (1 << 20))

    cost = pl.CostEstimate(
        flops=2 * G * TB * (2 * D * H + H),
        transcendentals=2 * G * TB,                      # exp + reciprocal per row
        bytes_accessed=(2 * b_in * D * itemsize          # inputs
                        + 4 * (2 * D * H + 2 * H + 1)    # weights / biases
                        + 4 * G * TB),                   # output
    )

    out = pl.pallas_call(
        confidence_kernel,
        out_shape=jax.ShapeDtypeStruct((G, R, LANES), jnp.float32),
        grid=(G,),
        in_specs=[
            pl.BlockSpec((TB, D), lambda i: (i, 0)),            # agent_caps (batch tiled)
            pl.BlockSpec((TB, D), lambda i: (i, 0)),            # task_embeds (batch tiled)
            pl.BlockSpec((D, H), lambda i: (0, 0)),             # W1[:D]   (VMEM-resident)
            pl.BlockSpec((D, H), lambda i: (0, 0)),             # W1[D:]   (VMEM-resident)
            pl.BlockSpec((1, H), lambda i: (0, 0)),             # b1       (VMEM-resident)
            pl.BlockSpec((1, H), lambda i: (0, 0)),             # W2 row   (VMEM-resident)
            pl.BlockSpec(memory_space=pltpu.MemorySpace.SMEM),  # b2 scalar in SMEM
        ],
        out_specs=pl.BlockSpec((1, R, LANES), lambda i: (i, 0, 0)),
        compiler_params=pltpu.CompilerParams(
            dimension_semantics=("parallel",),
            vmem_limit_bytes=int(vmem_limit),
        ),
        cost_estimate=cost,
    )(agent_caps, task_embeds, w1a, w1b, b1, w2_row, b2)

    # Lane-dense (G, R, 128) slab -> flat batch order; drop padding / overhang.
    return out.reshape(-1)[:B]


def init_params(key, capability_dim, hidden=64):
    """Deterministic synthetic parameters matching nn.Linear shapes."""
    k1, k2, k3, k4 = jax.random.split(key, 4)
    in_dim = capability_dim * 2
    # PyTorch nn.Linear stores weight as (out, in); we keep (in, out) for x @ W.
    bound1 = 1.0 / jnp.sqrt(in_dim)
    w1 = jax.random.uniform(k1, (in_dim, hidden), jnp.float32, -bound1, bound1)
    b1 = jax.random.uniform(k2, (1, hidden), jnp.float32, -bound1, bound1)
    bound2 = 1.0 / jnp.sqrt(hidden)
    w2_row = jax.random.uniform(k3, (1, hidden), jnp.float32, -bound2, bound2)  # W2^T row
    b2 = jax.random.uniform(k4, (1, 1), jnp.float32, -bound2, bound2)
    return (w1, b1, w2_row, b2)


def reference(agent_caps, task_embeds, params):
    w1, b1, w2_row, b2 = params
    x = jnp.concatenate([agent_caps, task_embeds], axis=1)
    h = jax.nn.relu(x @ w1 + b1)
    return jax.nn.sigmoid(h @ w2_row.T + b2)[:, 0]


if __name__ == "__main__":
    key = jax.random.PRNGKey(0)
    k_params, k_agent, k_task = jax.random.split(key, 3)

    capability_dim = 16
    params = init_params(k_params, capability_dim)

    # Small-shape check (single padded lane group).
    batch = 8
    agent_caps = jax.random.normal(k_agent, (batch, capability_dim), jnp.float32)
    task_embeds = jax.random.normal(k_task, (batch, capability_dim), jnp.float32)

    conf = confidence_estimator(agent_caps, task_embeds, params)
    conf = jax.block_until_ready(conf)
    ref = reference(agent_caps, task_embeds, params)
    assert conf.shape == (batch,)
    # approx=True reciprocal (EUP) has ~2^-12 relative error -> loosened tolerance.
    assert jnp.allclose(conf, ref, atol=2e-3, rtol=2e-3), (conf, ref)

    # Multi-step grid + ragged last block check (no full-array padding path).
    batch2 = 300
    a2 = jax.random.normal(jax.random.fold_in(k_agent, 1),
                           (batch2, capability_dim), jnp.float32)
    t2 = jax.random.normal(jax.random.fold_in(k_task, 1),
                           (batch2, capability_dim), jnp.float32)
    conf2 = jax.block_until_ready(confidence_estimator(a2, t2, params))
    ref2 = reference(a2, t2, params)
    assert conf2.shape == (batch2,)
    assert jnp.allclose(conf2, ref2, atol=2e-3, rtol=2e-3), (conf2, ref2)

    print("KERNEL_OK")
</pallas_src>

<mosaic_0001>
module attributes {stable_mosaic.version = 11 : i64} {
  func.func @confidence_kernel(%arg0: i32, %arg1: memref<128x16xf32, #tpu.memory_space<vmem>>, %arg2: memref<128x16xf32, #tpu.memory_space<vmem>>, %arg3: memref<16x64xf32, #tpu.memory_space<vmem>>, %arg4: memref<16x64xf32, #tpu.memory_space<vmem>>, %arg5: memref<1x64xf32, #tpu.memory_space<vmem>>, %arg6: memref<1x64xf32, #tpu.memory_space<vmem>>, %arg7: memref<1x1xf32, #tpu.memory_space<smem>>, %arg8: memref<1x1x128xf32, #tpu.memory_space<vmem>>) attributes {dimension_semantics = [#tpu.dimension_semantics<parallel>], iteration_bounds = array<i64: 1>, scalar_prefetch = 0 : i64, scratch_operands = 0 : i64, tpu.core_type = #tpu.core_type<tc>, window_params = [{transform_indices = @transform_0, window_bounds = array<i64: 128, 16>}, {transform_indices = @transform_1, window_bounds = array<i64: 128, 16>}, {pipeline_mode = #tpu.pipeline_mode<synchronous>, transform_indices = @transform_2, window_bounds = array<i64: 16, 64>}, {pipeline_mode = #tpu.pipeline_mode<synchronous>, transform_indices = @transform_3, window_bounds = array<i64: 16, 64>}, {pipeline_mode = #tpu.pipeline_mode<synchronous>, transform_indices = @transform_4, window_bounds = array<i64: 1, 64>}, {pipeline_mode = #tpu.pipeline_mode<synchronous>, transform_indices = @transform_5, window_bounds = array<i64: 1, 64>}, {transform_indices = @transform_6, window_bounds = array<i64: 1, 1>}, {transform_indices = @transform_7, window_bounds = array<i64: 1, 1, 128>}]} {
    %c0 = arith.constant 0 : index
    %c0_0 = arith.constant 0 : index
    %0 = vector.load %arg1[%c0, %c0_0] : memref<128x16xf32, #tpu.memory_space<vmem>>, vector<128x16xf32>
    %c0_1 = arith.constant 0 : index
    %c0_2 = arith.constant 0 : index
    %1 = vector.load %arg3[%c0_1, %c0_2] : memref<16x64xf32, #tpu.memory_space<vmem>>, vector<16x64xf32>
    %cst = arith.constant dense<0.000000e+00> : vector<128x64xf32>
    %2 = tpu.matmul %0, %1, %cst {dimension_numbers = #tpu.dot_dimension_numbers<[1], [0], [0], [1], [0, 0, 1, 1], [], []>} : vector<128x16xf32>, vector<16x64xf32>, vector<128x64xf32> -> vector<128x64xf32>
    %c0_3 = arith.constant 0 : index
    %c0_4 = arith.constant 0 : index
    %3 = vector.load %arg2[%c0_3, %c0_4] : memref<128x16xf32, #tpu.memory_space<vmem>>, vector<128x16xf32>
    %c0_5 = arith.constant 0 : index
    %c0_6 = arith.constant 0 : index
    %4 = vector.load %arg4[%c0_5, %c0_6] : memref<16x64xf32, #tpu.memory_space<vmem>>, vector<16x64xf32>
    %cst_7 = arith.constant dense<0.000000e+00> : vector<128x64xf32>
    %5 = tpu.matmul %3, %4, %cst_7 {dimension_numbers = #tpu.dot_dimension_numbers<[1], [0], [0], [1], [0, 0, 1, 1], [], []>} : vector<128x16xf32>, vector<16x64xf32>, vector<128x64xf32> -> vector<128x64xf32>
    %6 = arith.addf %2, %5 : vector<128x64xf32>
    %c0_8 = arith.constant 0 : index
    %c0_9 = arith.constant 0 : index
    %7 = vector.load %arg5[%c0_8, %c0_9] : memref<1x64xf32, #tpu.memory_space<vmem>>, vector<1x64xf32>
    %8 = vector.broadcast %7 : vector<1x64xf32> to vector<128x64xf32>
    %9 = arith.addf %6, %8 : vector<128x64xf32>
    %cst_10 = arith.constant 0.000000e+00 : f32
    %10 = vector.broadcast %cst_10 : f32 to vector<128x64xf32>
    %11 = arith.maximumf %9, %10 : vector<128x64xf32>
    %c0_11 = arith.constant 0 : index
    %c0_12 = arith.constant 0 : index
    %12 = vector.load %arg6[%c0_11, %c0_12] : memref<1x64xf32, #tpu.memory_space<vmem>>, vector<1x64xf32>
    %13 = vector.broadcast %12 : vector<1x64xf32> to vector<128x64xf32>
    %14 = arith.mulf %11, %13 : vector<128x64xf32>
    %15 = vector.shape_cast %14 : vector<128x64xf32> to vector<1x128x64xf32>
    %cst_13 = arith.constant dense<0.000000e+00> : vector<1x128xf32>
    %16 = vector.multi_reduction <add>, %15, %cst_13 [2] : vector<1x128x64xf32> to vector<1x128xf32>
    %c0_14 = arith.constant 0 : index
    %c0_15 = arith.constant 0 : index
    %17 = memref.load %arg7[%c0_14, %c0_15] : memref<1x1xf32, #tpu.memory_space<smem>>
    %18 = vector.broadcast %17 : f32 to vector<1x128xf32>
    %19 = arith.addf %16, %18 : vector<1x128xf32>
    %cst_16 = arith.constant 0.000000e+00 : f32
    %20 = vector.broadcast %cst_16 : f32 to vector<1x128xf32>
    %21 = arith.subf %20, %19 : vector<1x128xf32>
    %22 = math.exp %21 : vector<1x128xf32>
    %cst_17 = arith.constant 1.000000e+00 : f32
    %23 = vector.broadcast %cst_17 : f32 to vector<1x128xf32>
    %24 = arith.addf %23, %22 : vector<1x128xf32>
    %25 = tpu.reciprocal %24 {approx = true} : vector<1x128xf32> -> vector<1x128xf32>
    %c0_18 = arith.constant 0 : index
    %c0_19 = arith.constant 0 : index
    %c0_20 = arith.constant 0 : index
    %26 = vector.load %arg8[%c0_18, %c0_19, %c0_20] : memref<1x1x128xf32, #tpu.memory_space<vmem>>, vector<1x1x128xf32>
    %27 = vector.shape_cast %26 : vector<1x1x128xf32> to vector<1x128xf32>
    %28 = vector.shape_cast %25 : vector<1x128xf32> to vector<1x1x128xf32>
    tpu.vector_store %arg8[%c0_18, %c0_19, %c0_20], %28 {strides = array<i32>} : memref<1x1x128xf32, #tpu.memory_space<vmem>>, vector<1x1x128xf32>,
    return
  }
  func.func @transform_0(%arg0: i32) -> (i32, i32) {
    %c0_i32 = arith.constant 0 : i32
    %c0_i32_0 = arith.constant 0 : i32
    return %arg0, %c0_i32 : i32, i32
  }
  func.func @transform_1(%arg0: i32) -> (i32, i32) {
    %c0_i32 = arith.constant 0 : i32
    %c0_i32_0 = arith.constant 0 : i32
    return %arg0, %c0_i32 : i32, i32
  }
  func.func @transform_2(%arg0: i32) -> (i32, i32) {
    %c0_i32 = arith.constant 0 : i32
    %c0_i32_0 = arith.constant 0 : i32
    %c0_i32_1 = arith.constant 0 : i32
    return %c0_i32, %c0_i32_0 : i32, i32
  }
  func.func @transform_3(%arg0: i32) -> (i32, i32) {
    %c0_i32 = arith.constant 0 : i32
    %c0_i32_0 = arith.constant 0 : i32
    %c0_i32_1 = arith.constant 0 : i32
    return %c0_i32, %c0_i32_0 : i32, i32
  }
  func.func @transform_4(%arg0: i32) -> (i32, i32) {
    %c0_i32 = arith.constant 0 : i32
    %c0_i32_0 = arith.constant 0 : i32
    %c0_i32_1 = arith.constant 0 : i32
    return %c0_i32, %c0_i32_0 : i32, i32
  }
  func.func @transform_5(%arg0: i32) -> (i32, i32) {
    %c0_i32 = arith.constant 0 : i32
    %c0_i32_0 = arith.constant 0 : i32
    %c0_i32_1 = arith.constant 0 : i32
    return %c0_i32, %c0_i32_0 : i32, i32
  }
  func.func @transform_6(%arg0: i32) -> (i32, i32) {
    %c0_i32 = arith.constant 0 : i32
    %c0_i32_0 = arith.constant 0 : i32
    %c0_i32_1 = arith.constant 0 : i32
    return %c0_i32, %c0_i32_0 : i32, i32
  }
  func.func @transform_7(%arg0: i32) -> (i32, i32, i32) {
    %c0_i32 = arith.constant 0 : i32
    %c0_i32_0 = arith.constant 0 : i32
    %c0_i32_1 = arith.constant 0 : i32
    return %arg0, %c0_i32, %c0_i32_0 : i32, i32, i32
  }
}

</mosaic_0001>

<llo_original>
// kernel: tpu_custom_call.1
$region0: #{tpu_custom_call.1}
  #allocation0 [shape = 'u32[]', space=smem, size = 0x4, offset = 0x4, fixed_abs, tag = 'smem constant byte address 0x4 - core index']
  #allocation1 [shape = 'u32[72,128]{1,0:T(1,128)}', space=vmem, size = 0x9000, scoped, tag = 'internal scratch']
  #allocation2 [shape = 'f32[1,1]{1,0:T(1,128)S(6)}', space=smem, size = 0x200, scoped, tag = 'scoped memory for tpu_custom_call.1']
  %s0 = inlined_call_operand.vmem [shape: f32[128,16], index: 0, kind: input, shape index: {}]
  %s1 = inlined_call_operand.vmem [shape: f32[128,16], index: 1, kind: input, shape index: {}]
  %s2 = inlined_call_operand.vmem [shape: f32[16,64], index: 2, kind: input, shape index: {}]
  %s3 = inlined_call_operand.vmem [shape: f32[16,64], index: 3, kind: input, shape index: {}]
  %s4 = inlined_call_operand.vmem [shape: f32[1,64], index: 4, kind: input, shape index: {}]
  %s5 = inlined_call_operand.vmem [shape: f32[1,64], index: 5, kind: input, shape index: {}]
  %s6 = inlined_call_operand.<no memory space> [shape: f32[1,1], index: 6, kind: input, shape index: {}]
  %s7 = inlined_call_operand.hbm [shape: f32[1,1,128], index: 7, kind: output, shape index: {}]
  %s8 = sld [smem:[#allocation0]]
  $region38: #{tpu_custom_call.1} parent=0
    _
  %s10 = ssub.s32 1, %s8
  %s11 = scalar_select 0, %s10, %s8
  %12 = sst [smem:[#allocation2]] %s6
  $region1: #{tpu_custom_call.1} parent=0
    #allocation3 [shape = 'u8[512]{0}', space=vmem, size = 0x400, scoped, tag = 'output window, operand 0, single buffered']
    #allocation4 [shape = 's32[1]{0}', space=sflag, size = 0x4, scoped, tag = 'scoped memory for tpu_custom_call.1']
    %13 = vsyncpa [#allocation4], 0
    // Predicated region
    $region2: #{tpu_custom_call.1} parent=1 // pred_check
      _
    $region3: #{tpu_custom_call.1} parent=1 // pred_check_branch
      %15 = sbr.rel (0) target = $region5
    $region4: #{tpu_custom_call.1} parent=1 // pred_region
      _
    $region5: #{tpu_custom_call.1} parent=1 // pred_fallthru
      _
    // Predicated region
    $region6: #{tpu_custom_call.1} parent=1 // pred_check
      _
    $region7: #{tpu_custom_call.1} parent=1 // pred_check_branch
      %17 = sbr.rel (0) target = $region9
    $region8: #{tpu_custom_call.1} parent=1 // pred_region
      _
    $region9: #{tpu_custom_call.1} parent=1 // pred_fallthru
      _
    // Predicated region
    $region10: #{tpu_custom_call.1} parent=1 // pred_check
      _
    $region11: #{tpu_custom_call.1} parent=1 // pred_check_branch
      %19 = sbr.rel (0) target = $region13
    $region12: #{tpu_custom_call.1} parent=1 // pred_region
      _
    $region13: #{tpu_custom_call.1} parent=1 // pred_fallthru
      _
    // Predicated region
    $region14: #{tpu_custom_call.1} parent=1 // pred_check
      _
    $region15: #{tpu_custom_call.1} parent=1 // pred_check_branch
      %21 = sbr.rel (0) target = $region17
    $region16: #{tpu_custom_call.1} parent=1 // pred_region
      _
    $region17: #{tpu_custom_call.1} parent=1 // pred_fallthru
      _
    // Predicated region
    $region18: #{tpu_custom_call.1} parent=1 // pred_check
      _
    $region19: #{tpu_custom_call.1} parent=1 // pred_check_branch
      %23 = sbr.rel (0) target = $region21
    $region20: #{tpu_custom_call.1} parent=1 // pred_region
      _
    $region21: #{tpu_custom_call.1} parent=1 // pred_fallthru
      _
    // Predicated region
    $region22: #{tpu_custom_call.1} parent=1 // pred_check
      _
    $region23: #{tpu_custom_call.1} parent=1 // pred_check_branch
      %25 = sbr.rel (0) target = $region25
    $region24: #{tpu_custom_call.1} parent=1 // pred_region
      _
    $region25: #{tpu_custom_call.1} parent=1 // pred_fallthru
      _
    // Predicated region
    $region26: #{tpu_custom_call.1} parent=1 // pred_check
      _
    $region27: #{tpu_custom_call.1} parent=1 // pred_check_branch
      %27 = sbr.rel (0) target = $region29
    $region28: #{tpu_custom_call.1} parent=1 // pred_region
      _
    $region29: #{tpu_custom_call.1} parent=1 // pred_fallthru
      _
    %v28 = vld [vmem:[%s0] sm:$0xff]
    %v29 = vld [vmem:[%s0 + $0x8] sm:$0xff]
    %v30 = vld [vmem:[%s0 + $0x10] sm:$0xff]
    %v31 = vld [vmem:[%s0 + $0x18] sm:$0xff]
    %v32 = vld [vmem:[%s0 + $0x20] sm:$0xff]
    %v33 = vld [vmem:[%s0 + $0x28] sm:$0xff]
    %v34 = vld [vmem:[%s0 + $0x30] sm:$0xff]
    %v35 = vld [vmem:[%s0 + $0x38] sm:$0xff]
    %v36 = vld [vmem:[%s0 + $0x40] sm:$0xff]
    %v37 = vld [vmem:[%s0 + $0x48] sm:$0xff]
    %v38 = vld [vmem:[%s0 + $0x50] sm:$0xff]
    %v39 = vld [vmem:[%s0 + $0x58] sm:$0xff]
    %v40 = vld [vmem:[%s0 + $0x60] sm:$0xff]
    %v41 = vld [vmem:[%s0 + $0x68] sm:$0xff]
    %v42 = vld [vmem:[%s0 + $0x70] sm:$0xff]
    %v43 = vld [vmem:[%s0 + $0x78] sm:$0xff]
    %v44 = vld [vmem:[%s2] sm:$0xff]
    %v45 = vld [vmem:[%s2 + $0x8] sm:$0xff]
    %v46 = vld [vmem:[%s1] sm:$0xff]
    %v47 = vld [vmem:[%s1 + $0x8] sm:$0xff]
    %v48 = vld [vmem:[%s1 + $0x10] sm:$0xff]
    %v49 = vld [vmem:[%s1 + $0x18] sm:$0xff]
    %v50 = vld [vmem:[%s1 + $0x20] sm:$0xff]
    %v51 = vld [vmem:[%s1 + $0x28] sm:$0xff]
    %v52 = vld [vmem:[%s1 + $0x30] sm:$0xff]
    %v53 = vld [vmem:[%s1 + $0x38] sm:$0xff]
    %v54 = vld [vmem:[%s1 + $0x40] sm:$0xff]
    %v55 = vld [vmem:[%s1 + $0x48] sm:$0xff]
    %v56 = vld [vmem:[%s1 + $0x50] sm:$0xff]
    %v57 = vld [vmem:[%s1 + $0x58] sm:$0xff]
    %v58 = vld [vmem:[%s1 + $0x60] sm:$0xff]
    %v59 = vld [vmem:[%s1 + $0x68] sm:$0xff]
    %v60 = vld [vmem:[%s1 + $0x70] sm:$0xff]
    %v61 = vld [vmem:[%s1 + $0x78] sm:$0xff]
    %v62 = vld [vmem:[%s3] sm:$0xff]
    %v63 = vld [vmem:[%s3 + $0x8] sm:$0xff]
    %vm64 = vcmask 130048
    %v66 = vsel %vm64, %v46, 0
    %v69 = vsel %vm64, %v47, 0
    %v72 = vsel %vm64, %v48, 0
    %v75 = vsel %vm64, %v49, 0
    %v78 = vsel %vm64, %v50, 0
    %v81 = vsel %vm64, %v51, 0
    %v84 = vsel %vm64, %v52, 0
    %v87 = vsel %vm64, %v53, 0
    %v90 = vsel %vm64, %v54, 0
    %v93 = vsel %vm64, %v55, 0
    %v96 = vsel %vm64, %v56, 0
    %v99 = vsel %vm64, %v57, 0
    %v102 = vsel %vm64, %v58, 0
    %v105 = vsel %vm64, %v59, 0
    %v108 = vsel %vm64, %v60, 0
    %v111 = vsel %vm64, %v61, 0
    %113 = vmatpush.msra.mxu0 0.0
    %114 = vmatpush.msra.mxu0 0.0
    %115 = vmatpush.msra.mxu0 0.0
    %116 = vmatpush.msra.mxu0 0.0
    %117 = vmatpush.msra.mxu0 0.0
    %118 = vmatpush.msra.mxu0 0.0
    %119 = vmatpush.msra.mxu0 0.0
    %120 = vmatpush.msra.mxu0 0.0
    %121 = vmatpush.msra.mxu0 0.0
    %122 = vmatpush.msra.mxu0 0.0
    %123 = vmatpush.msra.mxu0 0.0
    %124 = vmatpush.msra.mxu0 0.0
    %125 = vmatpush.msra.mxu0 0.0
    %126 = vmatpush.msra.mxu0 0.0
    %127 = vmatpush.msra.mxu0 %v63
    %128 = vmatpush.msra.mxu0 %v62
    %129 = vmatmul.f32.gmra.mxu0 %v66
    %v130 = vpop.f32.mrf.mxu0
    %v131 = vadd.f32 0.0, %v130
    %132 = vmatmul.f32.gmra.mxu0 %v69
    %v133 = vpop.f32.mrf.mxu0
    %v134 = vadd.f32 0.0, %v133
    %135 = vmatmul.f32.gmra.mxu0 %v72
    %v136 = vpop.f32.mrf.mxu0
    %v137 = vadd.f32 0.0, %v136
    %138 = vmatmul.f32.gmra.mxu0 %v75
    %v139 = vpop.f32.mrf.mxu0
    %v140 = vadd.f32 0.0, %v139
    %141 = vmatmul.f32.gmra.mxu0 %v78
    %v142 = vpop.f32.mrf.mxu0
    %v143 = vadd.f32 0.0, %v142
    %144 = vmatmul.f32.gmra.mxu0 %v81
    %v145 = vpop.f32.mrf.mxu0
    %v146 = vadd.f32 0.0, %v145
    %147 = vmatmul.f32.gmra.mxu0 %v84
    %v148 = vpop.f32.mrf.mxu0
    %v149 = vadd.f32 0.0, %v148
    %150 = vmatmul.f32.gmra.mxu0 %v87
    %v151 = vpop.f32.mrf.mxu0
    %v152 = vadd.f32 0.0, %v151
    %153 = vmatmul.f32.gmra.mxu0 %v90
    %v154 = vpop.f32.mrf.mxu0
    %v155 = vadd.f32 0.0, %v154
    %156 = vmatmul.f32.gmra.mxu0 %v93
    %v157 = vpop.f32.mrf.mxu0
    %v158 = vadd.f32 0.0, %v157
    %159 = vmatmul.f32.gmra.mxu0 %v96
    %v160 = vpop.f32.mrf.mxu0
    %v161 = vadd.f32 0.0, %v160
    %162 = vmatmul.f32.gmra.mxu0 %v99
    %v163 = vpop.f32.mrf.mxu0
    %v164 = vadd.f32 0.0, %v163
    %165 = vmatmul.f32.gmra.mxu0 %v102
    %v166 = vpop.f32.mrf.mxu0
    %v167 = vadd.f32 0.0, %v166
    %168 = vmatmul.f32.gmra.mxu0 %v105
    %v169 = vpop.f32.mrf.mxu0
    %v170 = vadd.f32 0.0, %v169
    %171 = vmatmul.f32.gmra.mxu0 %v108
    %v172 = vpop.f32.mrf.mxu0
    %v173 = vadd.f32 0.0, %v172
    %174 = vmatmul.f32.gmra.mxu0 %v111
    %v175 = vpop.f32.mrf.mxu0
    %v176 = vadd.f32 0.0, %v175
    %177 = vdwg.mxu0
    %v179 = vsel %vm64, %v28, 0
    %v182 = vsel %vm64, %v29, 0
    %v185 = vsel %vm64, %v30, 0
    %v188 = vsel %vm64, %v31, 0
    %v191 = vsel %vm64, %v32, 0
    %v194 = vsel %vm64, %v33, 0
    %v197 = vsel %vm64, %v34, 0
    %v200 = vsel %vm64, %v35, 0
    %v203 = vsel %vm64, %v36, 0
    %v206 = vsel %vm64, %v37, 0
    %v209 = vsel %vm64, %v38, 0
    %v212 = vsel %vm64, %v39, 0
    %v215 = vsel %vm64, %v40, 0
    %v218 = vsel %vm64, %v41, 0
    %v221 = vsel %vm64, %v42, 0
    %v224 = vsel %vm64, %v43, 0
    %226 = vmatpush.msra.mxu0 0.0
    %227 = vmatpush.msra.mxu0 0.0
    %228 = vmatpush.msra.mxu0 0.0
    %229 = vmatpush.msra.mxu0 0.0
    %230 = vmatpush.msra.mxu0 0.0
    %231 = vmatpush.msra.mxu0 0.0
    %232 = vmatpush.msra.mxu0 0.0
    %233 = vmatpush.msra.mxu0 0.0
    %234 = vmatpush.msra.mxu0 0.0
    %235 = vmatpush.msra.mxu0 0.0
    %236 = vmatpush.msra.mxu0 0.0
    %237 = vmatpush.msra.mxu0 0.0
    %238 = vmatpush.msra.mxu0 0.0
    %239 = vmatpush.msra.mxu0 0.0
    %240 = vmatpush.msra.mxu0 %v45
    %241 = vmatpush.msra.mxu0 %v44
    %242 = vmatmul.f32.gmra.mxu0 %v179
    %v243 = vpop.f32.mrf.mxu0
    %v244 = vadd.f32 %v131, %v243
    %245 = vmatmul.f32.gmra.mxu0 %v182
    %v246 = vpop.f32.mrf.mxu0
    %v247 = vadd.f32 %v134, %v246
    %248 = vmatmul.f32.gmra.mxu0 %v185
    %v249 = vpop.f32.mrf.mxu0
    %v250 = vadd.f32 %v137, %v249
    %251 = vmatmul.f32.gmra.mxu0 %v188
    %v252 = vpop.f32.mrf.mxu0
    %v253 = vadd.f32 %v140, %v252
    %254 = vmatmul.f32.gmra.mxu0 %v191
    %v255 = vpop.f32.mrf.mxu0
    %v256 = vadd.f32 %v143, %v255
    %257 = vmatmul.f32.gmra.mxu0 %v194
    %v258 = vpop.f32.mrf.mxu0
    %v259 = vadd.f32 %v146, %v258
    %260 = vmatmul.f32.gmra.mxu0 %v197
    %v261 = vpop.f32.mrf.mxu0
    %v262 = vadd.f32 %v149, %v261
    %263 = vmatmul.f32.gmra.mxu0 %v200
    %v264 = vpop.f32.mrf.mxu0
    %v265 = vadd.f32 %v152, %v264
    %266 = vmatmul.f32.gmra.mxu0 %v203
    %v267 = vpop.f32.mrf.mxu0
    %v268 = vadd.f32 %v155, %v267
    %269 = vmatmul.f32.gmra.mxu0 %v206
    %v270 = vpop.f32.mrf.mxu0
    %v271 = vadd.f32 %v158, %v270
    %272 = vmatmul.f32.gmra.mxu0 %v209
    %v273 = vpop.f32.mrf.mxu0
    %v274 = vadd.f32 %v161, %v273
    %275 = vmatmul.f32.gmra.mxu0 %v212
    %v276 = vpop.f32.mrf.mxu0
    %v277 = vadd.f32 %v164, %v276
    %278 = vmatmul.f32.gmra.mxu0 %v215
    %v279 = vpop.f32.mrf.mxu0
    %v280 = vadd.f32 %v167, %v279
    %281 = vmatmul.f32.gmra.mxu0 %v218
    %v282 = vpop.f32.mrf.mxu0
    %v283 = vadd.f32 %v170, %v282
    %284 = vmatmul.f32.gmra.mxu0 %v221
    %v285 = vpop.f32.mrf.mxu0
    %v286 = vadd.f32 %v173, %v285
    %287 = vmatmul.f32.gmra.mxu0 %v224
    %v288 = vpop.f32.mrf.mxu0
    %v289 = vadd.f32 %v176, %v288
    %290 = vdwg.mxu0
    %v291 = vld [vmem:[%s4] sm:$0x1]
    %v293 = vperm.slane %v291, 0
    %v295 = vadd.f32 %v244, %v293
    %v296 = vadd.f32 %v247, %v293
    %v297 = vadd.f32 %v250, %v293
    %v298 = vadd.f32 %v253, %v293
    %v299 = vadd.f32 %v256, %v293
    %v300 = vadd.f32 %v259, %v293
    %v301 = vadd.f32 %v262, %v293
    %v302 = vadd.f32 %v265, %v293
    %v303 = vadd.f32 %v268, %v293
    %v304 = vadd.f32 %v271, %v293
    %v305 = vadd.f32 %v274, %v293
    %v306 = vadd.f32 %v277, %v293
    %v307 = vadd.f32 %v280, %v293
    %v308 = vadd.f32 %v283, %v293
    %v309 = vadd.f32 %v286, %v293
    %v310 = vadd.f32 %v289, %v293
    %v311 = vmax.f32 %v295, 0.0
    %v312 = vmax.f32 %v296, 0.0
    %v313 = vmax.f32 %v297, 0.0
    %v314 = vmax.f32 %v298, 0.0
    %v315 = vmax.f32 %v299, 0.0
    %v316 = vmax.f32 %v300, 0.0
    %v317 = vmax.f32 %v301, 0.0
    %v318 = vmax.f32 %v302, 0.0
    %v319 = vmax.f32 %v303, 0.0
    %v320 = vmax.f32 %v304, 0.0
    %v321 = vmax.f32 %v305, 0.0
    %v322 = vmax.f32 %v306, 0.0
    %v323 = vmax.f32 %v307, 0.0
    %v324 = vmax.f32 %v308, 0.0
    %v325 = vmax.f32 %v309, 0.0
    %v326 = vmax.f32 %v310, 0.0
    %v327 = vld [vmem:[%s5] sm:$0x1]
    %v329 = vperm.slane %v327, 0
    %v331 = vmul.f32 %v311, %v329
    %v332 = vmul.f32 %v312, %v329
    %v333 = vmul.f32 %v313, %v329
    %v334 = vmul.f32 %v314, %v329
    %v335 = vmul.f32 %v315, %v329
    %v336 = vmul.f32 %v316, %v329
    %v337 = vmul.f32 %v317, %v329
    %v338 = vmul.f32 %v318, %v329
    %v339 = vmul.f32 %v319, %v329
    %v340 = vmul.f32 %v320, %v329
    %v341 = vmul.f32 %v321, %v329
    %v342 = vmul.f32 %v322, %v329
    %v343 = vmul.f32 %v323, %v329
    %v344 = vmul.f32 %v324, %v329
    %v345 = vmul.f32 %v325, %v329
    %v346 = vmul.f32 %v326, %v329
    %vm347 = vcmask 523264
    %v348 = vsel %vm347, %v331, 0.0
    %349 = vadd.xlane.f32.xlu0 %v348
    %v350 = vpop.xlane.xlu0 %349
    %v351 = vsel %vm347, %v332, 0.0
    %352 = vadd.xlane.f32.xlu0 %v351
    %v353 = vpop.xlane.xlu0 %352
    %v354 = vsel %vm347, %v333, 0.0
    %355 = vadd.xlane.f32.xlu0 %v354
    %v356 = vpop.xlane.xlu0 %355
    %v357 = vsel %vm347, %v334, 0.0
    %358 = vadd.xlane.f32.xlu0 %v357
    %v359 = vpop.xlane.xlu0 %358
    %v360 = vsel %vm347, %v335, 0.0
    %361 = vadd.xlane.f32.xlu0 %v360
    %v362 = vpop.xlane.xlu0 %361
    %v363 = vsel %vm347, %v336, 0.0
    %364 = vadd.xlane.f32.xlu0 %v363
    %v365 = vpop.xlane.xlu0 %364
    %v366 = vsel %vm347, %v337, 0.0
    %367 = vadd.xlane.f32.xlu0 %v366
    %v368 = vpop.xlane.xlu0 %367
    %v369 = vsel %vm347, %v338, 0.0
    %370 = vadd.xlane.f32.xlu0 %v369
    %v371 = vpop.xlane.xlu0 %370
    %v372 = vsel %vm347, %v339, 0.0
    %373 = vadd.xlane.f32.xlu0 %v372
    %v374 = vpop.xlane.xlu0 %373
    %v375 = vsel %vm347, %v340, 0.0
    %376 = vadd.xlane.f32.xlu0 %v375
    %v377 = vpop.xlane.xlu0 %376
    %v378 = vsel %vm347, %v341, 0.0
    %379 = vadd.xlane.f32.xlu0 %v378
    %v380 = vpop.xlane.xlu0 %379
    %v381 = vsel %vm347, %v342, 0.0
    %382 = vadd.xlane.f32.xlu0 %v381
    %v383 = vpop.xlane.xlu0 %382
    %v384 = vsel %vm347, %v343, 0.0
    %385 = vadd.xlane.f32.xlu0 %v384
    %v386 = vpop.xlane.xlu0 %385
    %v387 = vsel %vm347, %v344, 0.0
    %388 = vadd.xlane.f32.xlu0 %v387
    %v389 = vpop.xlane.xlu0 %388
    %v390 = vsel %vm347, %v345, 0.0
    %391 = vadd.xlane.f32.xlu0 %v390
    %v392 = vpop.xlane.xlu0 %391
    %v393 = vsel %vm347, %v346, 0.0
    %394 = vadd.xlane.f32.xlu0 %v393
    %v395 = vpop.xlane.xlu0 %394
    %s396 = sld [smem:[#allocation2]]
    %v397 = vstv %s396
    %v398 = vadd.f32 %v350, %v397
    %v399 = vadd.f32 %v353, %v397
    %v400 = vadd.f32 %v356, %v397
    %v401 = vadd.f32 %v359, %v397
    %v402 = vadd.f32 %v362, %v397
    %v403 = vadd.f32 %v365, %v397
    %v404 = vadd.f32 %v368, %v397
    %v405 = vadd.f32 %v371, %v397
    %v406 = vadd.f32 %v374, %v397
    %v407 = vadd.f32 %v377, %v397
    %v408 = vadd.f32 %v380, %v397
    %v409 = vadd.f32 %v383, %v397
    %v410 = vadd.f32 %v386, %v397
    %v411 = vadd.f32 %v389, %v397
    %v412 = vadd.f32 %v392, %v397
    %v413 = vadd.f32 %v395, %v397
    %v414 = vsub.f32 0.0, %v398
    %v415 = vsub.f32 0.0, %v399
    %v416 = vsub.f32 0.0, %v400
    %v417 = vsub.f32 0.0, %v401
    %v418 = vsub.f32 0.0, %v402
    %v419 = vsub.f32 0.0, %v403
    %v420 = vsub.f32 0.0, %v404
    %v421 = vsub.f32 0.0, %v405
    %v422 = vsub.f32 0.0, %v406
    %v423 = vsub.f32 0.0, %v407
    %v424 = vsub.f32 0.0, %v408
    %v425 = vsub.f32 0.0, %v409
    %v426 = vsub.f32 0.0, %v410
    %v427 = vsub.f32 0.0, %v411
    %v428 = vsub.f32 0.0, %v412
    %v429 = vsub.f32 0.0, %v413
    %v430 = vmul.f32 %v414, 1.442695
    %v431 = vpow.pop %v430
    %v432 = vmul.f32 %v415, 1.442695
    %v433 = vpow.pop %v432
    %v434 = vmul.f32 %v416, 1.442695
    %v435 = vpow.pop %v434
    %v436 = vmul.f32 %v417, 1.442695
    %v437 = vpow.pop %v436
    %v438 = vmul.f32 %v418, 1.442695
    %v439 = vpow.pop %v438
    %v440 = vmul.f32 %v419, 1.442695
    %v441 = vpow.pop %v440
    %v442 = vmul.f32 %v420, 1.442695
    %v443 = vpow.pop %v442
    %v444 = vmul.f32 %v421, 1.442695
    %v445 = vpow.pop %v444
    %v446 = vmul.f32 %v422, 1.442695
    %v447 = vpow.pop %v446
    %v448 = vmul.f32 %v423, 1.442695
    %v449 = vpow.pop %v448
    %v450 = vmul.f32 %v424, 1.442695
    %v451 = vpow.pop %v450
    %v452 = vmul.f32 %v425, 1.442695
    %v453 = vpow.pop %v452
    %v454 = vmul.f32 %v426, 1.442695
    %v455 = vpow.pop %v454
    %v456 = vmul.f32 %v427, 1.442695
    %v457 = vpow.pop %v456
    %v458 = vmul.f32 %v428, 1.442695
    %v459 = vpow.pop %v458
    %v460 = vmul.f32 %v429, 1.442695
    %v461 = vpow.pop %v460
    %v462 = vadd.f32 %v431, 1.0
    %v463 = vadd.f32 %v433, 1.0
    %v464 = vadd.f32 %v435, 1.0
    %v465 = vadd.f32 %v437, 1.0
    %v466 = vadd.f32 %v439, 1.0
    %v467 = vadd.f32 %v441, 1.0
    %v468 = vadd.f32 %v443, 1.0
    %v469 = vadd.f32 %v445, 1.0
    %v470 = vadd.f32 %v447, 1.0
    %v471 = vadd.f32 %v449, 1.0
    %v472 = vadd.f32 %v451, 1.0
    %v473 = vadd.f32 %v453, 1.0
    %v474 = vadd.f32 %v455, 1.0
    %v475 = vadd.f32 %v457, 1.0
    %v476 = vadd.f32 %v459, 1.0
    %v477 = vadd.f32 %v461, 1.0
    %v478 = vrcp.pop %v462
    %v479 = vrcp.pop %v463
    %v480 = vrcp.pop %v464
    %v481 = vrcp.pop %v465
    %v482 = vrcp.pop %v466
    %v483 = vrcp.pop %v467
    %v484 = vrcp.pop %v468
    %v485 = vrcp.pop %v469
    %v486 = vrcp.pop %v470
    %v487 = vrcp.pop %v471
    %v488 = vrcp.pop %v472
    %v489 = vrcp.pop %v473
    %v490 = vrcp.pop %v474
    %v491 = vrcp.pop %v475
    %v492 = vrcp.pop %v476
    %v493 = vrcp.pop %v477
    %v510 = vlaneseq
    %v511 = vand.u32 %v510, 127
    %v512 = vperm.slane %v478, %v511
    %v513 = vadd.s32 %v511, 4294967288
    %v514 = vperm.slane %v479, %v513
    %vm515 = vcmask 130112
    %v516 = vsel %vm515, %v514, %v512
    %v517 = vadd.s32 %v511, 4294967280
    %v518 = vperm.slane %v480, %v517
    %vm519 = vcmask 195712
    %v520 = vsel %vm519, %v518, %v516
    %v521 = vadd.s32 %v511, 4294967272
    %v522 = vperm.slane %v481, %v521
    %vm523 = vcmask 261312
    %v524 = vsel %vm523, %v522, %v520
    %v525 = vadd.s32 %v511, 4294967264
    %v526 = vperm.slane %v482, %v525
    %vm527 = vcmask 326912
    %v528 = vsel %vm527, %v526, %v524
    %v529 = vadd.s32 %v511, 4294967256
    %v530 = vperm.slane %v483, %v529
    %vm531 = vcmask 392512
    %v532 = vsel %vm531, %v530, %v528
    %v533 = vadd.s32 %v511, 4294967248
    %v534 = vperm.slane %v484, %v533
    %vm535 = vcmask 458112
    %v536 = vsel %vm535, %v534, %v532
    %v537 = vadd.s32 %v511, 4294967240
    %v538 = vperm.slane %v485, %v537
    %vm539 = vcmask 523712
    %v540 = vsel %vm539, %v538, %v536
    %v541 = vadd.s32 %v511, 4294967232
    %v542 = vperm.slane %v486, %v541
    %vm543 = vcmask 589312
    %v544 = vsel %vm543, %v542, %v540
    %v545 = vadd.s32 %v511, 4294967224
    %v546 = vperm.slane %v487, %v545
    %vm547 = vcmask 654912
    %v548 = vsel %vm547, %v546, %v544
    %v549 = vadd.s32 %v511, 4294967216
    %v550 = vperm.slane %v488, %v549
    %vm551 = vcmask 720512
    %v552 = vsel %vm551, %v550, %v548
    %v553 = vadd.s32 %v511, 4294967208
    %v554 = vperm.slane %v489, %v553
    %vm555 = vcmask 786112
    %v556 = vsel %vm555, %v554, %v552
    %v557 = vadd.s32 %v511, 4294967200
    %v558 = vperm.slane %v490, %v557
    %vm559 = vcmask 851712
    %v560 = vsel %vm559, %v558, %v556
    %v561 = vadd.s32 %v511, 4294967192
    %v562 = vperm.slane %v491, %v561
    %vm563 = vcmask 917312
    %v564 = vsel %vm563, %v562, %v560
    %v565 = vadd.s32 %v511, 4294967184
    %v566 = vperm.slane %v492, %v565
    %vm567 = vcmask 982912
    %v568 = vsel %vm567, %v566, %v564
    %v569 = vadd.s32 %v511, 4294967176
    %v570 = vperm.slane %v493, %v569
    %vm571 = vcmask 1048512
    %v572 = vsel %vm571, %v570, %v568
    %574 = vst [vmem:[#allocation3] sm:$0x1] %v572
    // Predicated region
    $region30: #{tpu_custom_call.1} parent=1 // pred_check
      _
    $region31: #{tpu_custom_call.1} parent=1 // pred_check_branch
      %576 = sbr.rel (0) target = $region33
    $region32: #{tpu_custom_call.1} parent=1 // pred_region
      %578 = vsyncadd [#allocation4], 0
      %s580 = sshll.u32 [#allocation3], 4
      %s581 = int_to_ptr.vmem [resolvable:$true] %s580
      %s582 = sshll.u32 %s7, 4
      %s583 = int_to_ptr.hbm [resolvable:$true] %s582
      %585 = dma.vmem_to_hbm [thread:$0]  %s581, 16, %s583, [#allocation4]
    $region33: #{tpu_custom_call.1} parent=1 // pred_fallthru
      _
    // Predicated region
    $region34: #{tpu_custom_call.1} parent=1 // pred_check
      _
    $region35: #{tpu_custom_call.1} parent=1 // pred_check_branch
      %587 = sbr.rel (0) target = $region37
    $region36: #{tpu_custom_call.1} parent=1 // pred_region
      %589 = dma.done [#allocation4], 16
    $region37: #{tpu_custom_call.1} parent=1 // pred_fallthru
      _
    %590 = vsyncpa [#allocation4], 1

</llo_original>
